<compile_context>
chip_gen: v5e
topology: v5e:2x2
jax: 0.10.0
libtpu: 0.0.40
codegen_flags: <defaults>
</compile_context>

<pallas_src>
import jax
import jax.numpy as jnp
from jax.experimental import pallas as pl
from jax.experimental.pallas import tpu as pltpu

EPS = 1e-5  # nn.BatchNorm2d default eps


# --------------------------- one-time weight packing --------------------------

def _make_conv_matrix(k, W):
    """Pack a (3,3,Cin,Cout) HWIO kernel into a (3*W*Cin, W*Cout) block-Toeplitz
    matrix so a 'SAME' 3x3 conv over rows laid out with (w*Cin + cin) lanes
    becomes a plain matmul per kh tap.  W zero-padding is encoded (out-of-range
    kw taps are simply absent)."""
    _, _, Cin, Cout = k.shape
    blocks = []
    for kh in range(3):
        m = jnp.zeros((W, Cin, W, Cout), k.dtype)
        for kw in range(3):
            shift = jnp.eye(W, k=1 - kw, dtype=k.dtype)      # [w_in, w_out]
            m = m + jnp.einsum("io,cd->icod", shift, k[kh, kw])
        blocks.append(m.reshape(W * Cin, W * Cout))
    return jnp.concatenate(blocks, axis=0)


def pack_constants(params, N, H, W):
    """One-time repack of Encoder params (+ masks / pooling matrix) into a
    single lane-dense constant tensor consumed by the kernel.  Hoisted out of
    the per-call path so the per-forward cost is just the pallas_call."""
    Cin, Cout = params["w1"].shape[2], params["w1"].shape[3]
    WC_in, WC_out, NH = W * Cin, W * Cout, N * H

    w1_mat = _make_conv_matrix(params["w1"], W)                # (3*WC_in,  WC_out)
    w2_mat = _make_conv_matrix(params["w2"], W)                # (3*WC_out, WC_out)
    # pool[(w,c),(w2,c2)] = (c == c2): one matmul both reduces the per-channel
    # stats over w and re-broadcasts them to every lane.
    pool = jnp.tile(jnp.eye(Cout, dtype=jnp.float32), (W, W))  # (WC_out, WC_out)

    # Per-image halo-row masks for the H direction of the 3x3 conv:
    #   mprev zeroes the (row-1) tap on each image's first row,
    #   mnext zeroes the (row+1) tap on each image's last row.
    hin = jnp.arange(NH) % H
    mprev = jnp.broadcast_to((hin != 0).astype(jnp.float32)[:, None], (NH, WC_out))
    mnext = jnp.broadcast_to((hin != H - 1).astype(jnp.float32)[:, None], (NH, WC_out))

    bn = jnp.stack([jnp.tile(params["g1"], W), jnp.tile(params["be1"], W),
                    jnp.tile(params["g2"], W), jnp.tile(params["be2"], W)],
                   axis=0)                                     # (4, WC_out)

    offsets, parts, row = {}, [], 0
    for name, arr in (("w1", w1_mat), ("w2", w2_mat), ("pool", pool),
                      ("mprev", mprev), ("mnext", mnext), ("bn", bn)):
        offsets[name] = row                                    # all multiples of 8
        parts.append(arr)
        row += arr.shape[0]
    pad = -row % 8
    if pad:
        parts.append(jnp.zeros((pad, WC_out), jnp.float32))
    const = jnp.concatenate(parts, axis=0)                     # (rows, WC_out)

    dims = dict(N=N, H=H, W=W, Cin=Cin, Cout=Cout,
                WC_in=WC_in, WC_out=WC_out, NH=NH)
    return dict(const=const, offsets=offsets, dims=dims)


# --------------------------------- forward ------------------------------------

def encoder_forward(x_nchw, packed):
    const, off, d = packed["const"], packed["offsets"], packed["dims"]
    N, H, W = d["N"], d["H"], d["W"]
    Cin, Cout = d["Cin"], d["Cout"]
    WC_in, WC_out, NH = d["WC_in"], d["WC_out"], d["NH"]
    inv_cnt = 1.0 / float(N * H * W)

    assert x_nchw.shape == (N, Cin, H, W), x_nchw.shape
    x = jnp.transpose(x_nchw, (0, 2, 3, 1)).astype(jnp.float32)   # NCHW -> NHWC
    x_rows = x.reshape(NH, WC_in)                                 # (N*H, W*Cin)

    def kernel(x_ref, c_ref, out_ref, stats_ref):
        def conv3x3(h, w_off, wc):
            """3x3 SAME conv = 3 accumulated MXU matmuls (one per kh tap).
            W zero-padding is inside the packed weight blocks; H zero-padding
            is a sublane roll (XLU) + per-image first/last-row output mask."""
            mprev = c_ref[off["mprev"]:off["mprev"] + NH, :]
            mnext = c_ref[off["mnext"]:off["mnext"] + NH, :]
            # center tap (kh = 1)
            acc = jnp.dot(h, c_ref[w_off + wc:w_off + 2 * wc, :],
                          preferred_element_type=jnp.float32)
            # kh = 0 tap: row r needs row r-1  -> roll by +1, mask first rows
            up = pltpu.roll(h, shift=1, axis=0)
            acc = acc + mprev * jnp.dot(up, c_ref[w_off:w_off + wc, :],
                                        preferred_element_type=jnp.float32)
            # kh = 2 tap: row r needs row r+1  -> roll by -1 (== NH-1), mask last rows
            dn = pltpu.roll(h, shift=NH - 1, axis=0)
            acc = acc + mnext * jnp.dot(dn, c_ref[w_off + 2 * wc:w_off + 3 * wc, :],
                                        preferred_element_type=jnp.float32)
            return acc

        def bn_relu(h, bn_row):
            """Train-mode BatchNorm (per channel over N,H,W) + ReLU, lane-dense."""
            g = c_ref[off["bn"] + bn_row:off["bn"] + bn_row + 1, :]
            be = c_ref[off["bn"] + bn_row + 1:off["bn"] + bn_row + 2, :]
            stats_ref[0:1, :] = jnp.sum(h, axis=0, keepdims=True)        # sum
            stats_ref[1:2, :] = jnp.sum(h * h, axis=0, keepdims=True)    # sumsq
            pooled = jnp.dot(stats_ref[...],                             # (8,128) tile
                             c_ref[off["pool"]:off["pool"] + WC_out, :],
                             preferred_element_type=jnp.float32)
            mean = pooled[0:1, :] * inv_cnt
            var = pooled[1:2, :] * inv_cnt - mean * mean      # biased, like PyTorch
            scale = g * jax.lax.rsqrt(var + EPS)
            shift = be - mean * scale
            return jnp.maximum(h * scale + shift, 0.0)

        stats_ref[...] = jnp.zeros_like(stats_ref)            # rows 2..7 stay zero
        h = bn_relu(conv3x3(x_ref[...], off["w1"], WC_in), 0)       # block
        out_ref[...] = bn_relu(conv3x3(h, off["w2"], WC_out), 2)    # block_out

    def full_spec(shape):
        return pl.BlockSpec(shape, lambda *_: (0,) * len(shape))

    flops = (2 * NH * 3 * WC_in * WC_out        # conv1: 3 accumulated matmuls
             + 2 * NH * 3 * WC_out * WC_out     # conv2
             + 2 * 2 * 8 * WC_out * WC_out)     # 2 BN stat-pooling matmuls
    bytes_accessed = int((x_rows.size + const.size + NH * WC_out) * 4)
    cost = pl.CostEstimate(flops=int(flops), transcendentals=2 * WC_out,
                           bytes_accessed=bytes_accessed)

    out_rows = pl.pallas_call(
        kernel,
        out_shape=jax.ShapeDtypeStruct((NH, WC_out), jnp.float32),
        grid=(1,),  # single step: train-mode BN needs full-batch statistics
        in_specs=[full_spec(x_rows.shape), full_spec(const.shape)],
        out_specs=full_spec((NH, WC_out)),                  # lane-dense output slab
        scratch_shapes=[pltpu.VMEM((8, WC_out), jnp.float32)],
        compiler_params=pltpu.CompilerParams(
            dimension_semantics=("arbitrary",)),
        cost_estimate=cost,
    )(x_rows, const)
    # TODO(synk): at production sizes switch to (a) bf16 conv operands on
    # v6e/v7x with f32 accumulation (re-validate the 1e-3 tolerance), and
    # (b) a row-tiled two-pass BN (stats pass with centered sumsq + normalize
    # pass) on a 'parallel' grid axis sized for v7x's 64 MiB VMEM so both
    # TensorCores are used; at 2x16x16 the single-slab form wins.

    out_nhwc = out_rows.reshape(N, H, W, Cout)
    return jnp.transpose(out_nhwc, (0, 3, 1, 2))                   # NHWC -> NCHW


# ---------------------------- params & reference -----------------------------

def init_params(key, n_in, n_out):
    k1, k2, k3, k4 = jax.random.split(key, 4)
    fan1 = float(n_in * 9)
    fan2 = float(n_out * 9)
    # Kaiming-uniform-style deterministic init (HWIO layout for the kernel)
    w1 = jax.random.uniform(k1, (3, 3, n_in, n_out), jnp.float32, -1.0, 1.0) / jnp.sqrt(fan1)
    b1 = jax.random.uniform(k2, (n_out,), jnp.float32, -1.0, 1.0) / jnp.sqrt(fan1)
    w2 = jax.random.uniform(k3, (3, 3, n_out, n_out), jnp.float32, -1.0, 1.0) / jnp.sqrt(fan2)
    b2 = jax.random.uniform(k4, (n_out,), jnp.float32, -1.0, 1.0) / jnp.sqrt(fan2)
    return dict(
        w1=w1, b1=b1, g1=jnp.ones((n_out,), jnp.float32), be1=jnp.zeros((n_out,), jnp.float32),
        w2=w2, b2=b2, g2=jnp.ones((n_out,), jnp.float32), be2=jnp.zeros((n_out,), jnp.float32),
    )


def reference_forward(x_nchw, params):
    """Pure-JAX reference matching the PyTorch forward (train-mode BN, ReLU).
    Includes the conv biases; the kernel drops them because BN cancels them."""
    x = jnp.transpose(x_nchw, (0, 2, 3, 1)).astype(jnp.float32)

    def block(h, w, b, g, be):
        h = jax.lax.conv_general_dilated(
            h, w, (1, 1), "SAME", dimension_numbers=("NHWC", "HWIO", "NHWC"))
        h = h + b
        mean = jnp.mean(h, axis=(0, 1, 2), keepdims=True)
        var = jnp.mean((h - mean) ** 2, axis=(0, 1, 2), keepdims=True)
        h = (h - mean) * jax.lax.rsqrt(var + EPS) * g + be
        return jnp.maximum(h, 0.0)

    h = block(x, params["w1"], params["b1"], params["g1"], params["be1"])
    h = block(h, params["w2"], params["b2"], params["g2"], params["be2"])
    return jnp.transpose(h, (0, 3, 1, 2))


# ----------------------------------- main -------------------------------------

if __name__ == "__main__":
    key = jax.random.PRNGKey(0)
    kx, kp = jax.random.split(key)

    N, C_IN, C_OUT, H, W = 2, 4, 8, 16, 16
    x = jax.random.normal(kx, (N, C_IN, H, W), jnp.float32)   # NCHW like PyTorch
    params = init_params(kp, C_IN, C_OUT)

    packed = pack_constants(params, N=N, H=H, W=W)            # one-time repack

    out = jax.block_until_ready(encoder_forward(x, packed))
    ref = jax.block_until_ready(reference_forward(x, params))

    assert out.shape == (N, C_OUT, H, W), out.shape
    err = float(jnp.max(jnp.abs(out - ref)))
    assert jnp.allclose(out, ref, atol=1e-3, rtol=1e-3), err
    print("KERNEL_OK")
</pallas_src>

<mosaic_0001>
module attributes {stable_mosaic.version = 11 : i64} {
  func.func @kernel(%arg0: i32, %arg1: memref<32x64xf32, #tpu.memory_space<vmem>>, %arg2: memref<776x128xf32, #tpu.memory_space<vmem>>, %arg3: memref<32x128xf32, #tpu.memory_space<vmem>>, %arg4: memref<8x128xf32, #tpu.memory_space<vmem>>) attributes {dimension_semantics = [#tpu.dimension_semantics<arbitrary>], iteration_bounds = array<i64: 1>, scalar_prefetch = 0 : i64, scratch_operands = 1 : i64, tpu.core_type = #tpu.core_type<tc>, window_params = [{pipeline_mode = #tpu.pipeline_mode<synchronous>, transform_indices = @transform_0, window_bounds = array<i64: 32, 64>}, {pipeline_mode = #tpu.pipeline_mode<synchronous>, transform_indices = @transform_1, window_bounds = array<i64: 776, 128>}, {pipeline_mode = #tpu.pipeline_mode<synchronous>, transform_indices = @transform_2, window_bounds = array<i64: 32, 128>}]} {
    %cst = arith.constant 0.000000e+00 : f32
    %0 = vector.broadcast %cst : f32 to vector<8x128xf32>
    %c0 = arith.constant 0 : index
    %c0_0 = arith.constant 0 : index
    %1 = vector.load %arg4[%c0, %c0_0] : memref<8x128xf32, #tpu.memory_space<vmem>>, vector<8x128xf32>
    tpu.vector_store %arg4[%c0, %c0_0], %0 {strides = array<i32>} : memref<8x128xf32, #tpu.memory_space<vmem>>, vector<8x128xf32>,
    %c0_1 = arith.constant 0 : index
    %c0_2 = arith.constant 0 : index
    %2 = vector.load %arg1[%c0_1, %c0_2] : memref<32x64xf32, #tpu.memory_space<vmem>>, vector<32x64xf32>
    %c704 = arith.constant 704 : index
    %c0_3 = arith.constant 0 : index
    %3 = vector.load %arg2[%c704, %c0_3] : memref<776x128xf32, #tpu.memory_space<vmem>>, vector<32x128xf32>
    %c736 = arith.constant 736 : index
    %c0_4 = arith.constant 0 : index
    %4 = vector.load %arg2[%c736, %c0_4] : memref<776x128xf32, #tpu.memory_space<vmem>>, vector<32x128xf32>
    %c64 = arith.constant 64 : index
    %c0_5 = arith.constant 0 : index
    %5 = vector.load %arg2[%c64, %c0_5] : memref<776x128xf32, #tpu.memory_space<vmem>>, vector<64x128xf32>
    %cst_6 = arith.constant dense<0.000000e+00> : vector<32x128xf32>
    %6 = tpu.matmul %2, %5, %cst_6 {dimension_numbers = #tpu.dot_dimension_numbers<[1], [0], [0], [1], [0, 0, 1, 1], [], []>} : vector<32x64xf32>, vector<64x128xf32>, vector<32x128xf32> -> vector<32x128xf32>
    %c1_i32 = arith.constant 1 : i32
    %7 = tpu.dynamic_rotate %2 by %c1_i32 dim 0 : vector<32x64xf32>, i32 -> vector<32x64xf32>
    %c0_7 = arith.constant 0 : index
    %c0_8 = arith.constant 0 : index
    %8 = vector.load %arg2[%c0_7, %c0_8] : memref<776x128xf32, #tpu.memory_space<vmem>>, vector<64x128xf32>
    %cst_9 = arith.constant dense<0.000000e+00> : vector<32x128xf32>
    %9 = tpu.matmul %7, %8, %cst_9 {dimension_numbers = #tpu.dot_dimension_numbers<[1], [0], [0], [1], [0, 0, 1, 1], [], []>} : vector<32x64xf32>, vector<64x128xf32>, vector<32x128xf32> -> vector<32x128xf32>
    %10 = arith.mulf %3, %9 : vector<32x128xf32>
    %11 = arith.addf %6, %10 : vector<32x128xf32>
    %c31_i32 = arith.constant 31 : i32
    %12 = tpu.dynamic_rotate %2 by %c31_i32 dim 0 : vector<32x64xf32>, i32 -> vector<32x64xf32>
    %c128 = arith.constant 128 : index
    %c0_10 = arith.constant 0 : index
    %13 = vector.load %arg2[%c128, %c0_10] : memref<776x128xf32, #tpu.memory_space<vmem>>, vector<64x128xf32>
    %cst_11 = arith.constant dense<0.000000e+00> : vector<32x128xf32>
    %14 = tpu.matmul %12, %13, %cst_11 {dimension_numbers = #tpu.dot_dimension_numbers<[1], [0], [0], [1], [0, 0, 1, 1], [], []>} : vector<32x64xf32>, vector<64x128xf32>, vector<32x128xf32> -> vector<32x128xf32>
    %15 = arith.mulf %4, %14 : vector<32x128xf32>
    %16 = arith.addf %11, %15 : vector<32x128xf32>
    %c768 = arith.constant 768 : index
    %c0_12 = arith.constant 0 : index
    %17 = vector.load %arg2[%c768, %c0_12] : memref<776x128xf32, #tpu.memory_space<vmem>>, vector<1x128xf32>
    %c769 = arith.constant 769 : index
    %c0_13 = arith.constant 0 : index
    %18 = vector.load %arg2[%c769, %c0_13] : memref<776x128xf32, #tpu.memory_space<vmem>>, vector<1x128xf32>
    %cst_14 = arith.constant dense<0.000000e+00> : vector<128xf32>
    %19 = vector.multi_reduction <add>, %16, %cst_14 [0] : vector<32x128xf32> to vector<128xf32>
    %20 = vector.shape_cast %19 : vector<128xf32> to vector<1x128xf32>
    %c0_15 = arith.constant 0 : index
    %c0_16 = arith.constant 0 : index
    %21 = vector.load %arg4[%c0_15, %c0_16] : memref<8x128xf32, #tpu.memory_space<vmem>>, vector<1x128xf32>
    tpu.vector_store %arg4[%c0_15, %c0_16], %20 {strides = array<i32>} : memref<8x128xf32, #tpu.memory_space<vmem>>, vector<1x128xf32>,
    %22 = arith.mulf %16, %16 : vector<32x128xf32>
    %cst_17 = arith.constant dense<0.000000e+00> : vector<128xf32>
    %23 = vector.multi_reduction <add>, %22, %cst_17 [0] : vector<32x128xf32> to vector<128xf32>
    %24 = vector.shape_cast %23 : vector<128xf32> to vector<1x128xf32>
    %c1 = arith.constant 1 : index
    %c0_18 = arith.constant 0 : index
    %25 = vector.load %arg4[%c1, %c0_18] : memref<8x128xf32, #tpu.memory_space<vmem>>, vector<1x128xf32>
    tpu.vector_store %arg4[%c1, %c0_18], %24 {strides = array<i32>} : memref<8x128xf32, #tpu.memory_space<vmem>>, vector<1x128xf32>,
    %c0_19 = arith.constant 0 : index
    %c0_20 = arith.constant 0 : index
    %26 = vector.load %arg4[%c0_19, %c0_20] : memref<8x128xf32, #tpu.memory_space<vmem>>, vector<8x128xf32>
    %c576 = arith.constant 576 : index
    %c0_21 = arith.constant 0 : index
    %27 = vector.load %arg2[%c576, %c0_21] : memref<776x128xf32, #tpu.memory_space<vmem>>, vector<128x128xf32>
    %cst_22 = arith.constant dense<0.000000e+00> : vector<8x128xf32>
    %28 = tpu.matmul %26, %27, %cst_22 {dimension_numbers = #tpu.dot_dimension_numbers<[1], [0], [0], [1], [0, 0, 1, 1], [], []>} : vector<8x128xf32>, vector<128x128xf32>, vector<8x128xf32> -> vector<8x128xf32>
    %29 = vector.extract_strided_slice %28 {offsets = [0, 0], sizes = [1, 128], strides = [1, 1]} : vector<8x128xf32> to vector<1x128xf32>
    %cst_23 = arith.constant 0.001953125 : f32
    %30 = vector.broadcast %cst_23 : f32 to vector<1x128xf32>
    %31 = arith.mulf %29, %30 : vector<1x128xf32>
    %32 = vector.extract_strided_slice %28 {offsets = [1, 0], sizes = [1, 128], strides = [1, 1]} : vector<8x128xf32> to vector<1x128xf32>
    %cst_24 = arith.constant 0.001953125 : f32
    %33 = vector.broadcast %cst_24 : f32 to vector<1x128xf32>
    %34 = arith.mulf %32, %33 : vector<1x128xf32>
    %35 = arith.mulf %31, %31 : vector<1x128xf32>
    %36 = arith.subf %34, %35 : vector<1x128xf32>
    %cst_25 = arith.constant 9.99999974E-6 : f32
    %37 = vector.broadcast %cst_25 : f32 to vector<1x128xf32>
    %38 = arith.addf %36, %37 : vector<1x128xf32>
    %39 = math.rsqrt %38 : vector<1x128xf32>
    %40 = arith.mulf %17, %39 : vector<1x128xf32>
    %41 = arith.mulf %31, %40 : vector<1x128xf32>
    %42 = arith.subf %18, %41 : vector<1x128xf32>
    %43 = vector.broadcast %40 : vector<1x128xf32> to vector<32x128xf32>
    %44 = arith.mulf %16, %43 : vector<32x128xf32>
    %45 = vector.broadcast %42 : vector<1x128xf32> to vector<32x128xf32>
    %46 = arith.addf %44, %45 : vector<32x128xf32>
    %cst_26 = arith.constant 0.000000e+00 : f32
    %47 = vector.broadcast %cst_26 : f32 to vector<32x128xf32>
    %48 = arith.maximumf %46, %47 : vector<32x128xf32>
    %c704_27 = arith.constant 704 : index
    %c0_28 = arith.constant 0 : index
    %49 = vector.load %arg2[%c704_27, %c0_28] : memref<776x128xf32, #tpu.memory_space<vmem>>, vector<32x128xf32>
    %c736_29 = arith.constant 736 : index
    %c0_30 = arith.constant 0 : index
    %50 = vector.load %arg2[%c736_29, %c0_30] : memref<776x128xf32, #tpu.memory_space<vmem>>, vector<32x128xf32>
    %c320 = arith.constant 320 : index
    %c0_31 = arith.constant 0 : index
    %51 = vector.load %arg2[%c320, %c0_31] : memref<776x128xf32, #tpu.memory_space<vmem>>, vector<128x128xf32>
    %cst_32 = arith.constant dense<0.000000e+00> : vector<32x128xf32>
    %52 = tpu.matmul %48, %51, %cst_32 {dimension_numbers = #tpu.dot_dimension_numbers<[1], [0], [0], [1], [0, 0, 1, 1], [], []>} : vector<32x128xf32>, vector<128x128xf32>, vector<32x128xf32> -> vector<32x128xf32>
    %c1_i32_33 = arith.constant 1 : i32
    %53 = tpu.dynamic_rotate %48 by %c1_i32_33 dim 0 : vector<32x128xf32>, i32 -> vector<32x128xf32>
    %c192 = arith.constant 192 : index
    %c0_34 = arith.constant 0 : index
    %54 = vector.load %arg2[%c192, %c0_34] : memref<776x128xf32, #tpu.memory_space<vmem>>, vector<128x128xf32>
    %cst_35 = arith.constant dense<0.000000e+00> : vector<32x128xf32>
    %55 = tpu.matmul %53, %54, %cst_35 {dimension_numbers = #tpu.dot_dimension_numbers<[1], [0], [0], [1], [0, 0, 1, 1], [], []>} : vector<32x128xf32>, vector<128x128xf32>, vector<32x128xf32> -> vector<32x128xf32>
    %56 = arith.mulf %49, %55 : vector<32x128xf32>
    %57 = arith.addf %52, %56 : vector<32x128xf32>
    %c31_i32_36 = arith.constant 31 : i32
    %58 = tpu.dynamic_rotate %48 by %c31_i32_36 dim 0 : vector<32x128xf32>, i32 -> vector<32x128xf32>
    %c448 = arith.constant 448 : index
    %c0_37 = arith.constant 0 : index
    %59 = vector.load %arg2[%c448, %c0_37] : memref<776x128xf32, #tpu.memory_space<vmem>>, vector<128x128xf32>
    %cst_38 = arith.constant dense<0.000000e+00> : vector<32x128xf32>
    %60 = tpu.matmul %58, %59, %cst_38 {dimension_numbers = #tpu.dot_dimension_numbers<[1], [0], [0], [1], [0, 0, 1, 1], [], []>} : vector<32x128xf32>, vector<128x128xf32>, vector<32x128xf32> -> vector<32x128xf32>
    %61 = arith.mulf %50, %60 : vector<32x128xf32>
    %62 = arith.addf %57, %61 : vector<32x128xf32>
    %c770 = arith.constant 770 : index
    %c0_39 = arith.constant 0 : index
    %63 = vector.load %arg2[%c770, %c0_39] : memref<776x128xf32, #tpu.memory_space<vmem>>, vector<1x128xf32>
    %c771 = arith.constant 771 : index
    %c0_40 = arith.constant 0 : index
    %64 = vector.load %arg2[%c771, %c0_40] : memref<776x128xf32, #tpu.memory_space<vmem>>, vector<1x128xf32>
    %cst_41 = arith.constant dense<0.000000e+00> : vector<128xf32>
    %65 = vector.multi_reduction <add>, %62, %cst_41 [0] : vector<32x128xf32> to vector<128xf32>
    %66 = vector.shape_cast %65 : vector<128xf32> to vector<1x128xf32>
    %c0_42 = arith.constant 0 : index
    %c0_43 = arith.constant 0 : index
    %67 = vector.load %arg4[%c0_42, %c0_43] : memref<8x128xf32, #tpu.memory_space<vmem>>, vector<1x128xf32>
    tpu.vector_store %arg4[%c0_42, %c0_43], %66 {strides = array<i32>} : memref<8x128xf32, #tpu.memory_space<vmem>>, vector<1x128xf32>,
    %68 = arith.mulf %62, %62 : vector<32x128xf32>
    %cst_44 = arith.constant dense<0.000000e+00> : vector<128xf32>
    %69 = vector.multi_reduction <add>, %68, %cst_44 [0] : vector<32x128xf32> to vector<128xf32>
    %70 = vector.shape_cast %69 : vector<128xf32> to vector<1x128xf32>
    %c1_45 = arith.constant 1 : index
    %c0_46 = arith.constant 0 : index
    %71 = vector.load %arg4[%c1_45, %c0_46] : memref<8x128xf32, #tpu.memory_space<vmem>>, vector<1x128xf32>
    tpu.vector_store %arg4[%c1_45, %c0_46], %70 {strides = array<i32>} : memref<8x128xf32, #tpu.memory_space<vmem>>, vector<1x128xf32>,
    %c0_47 = arith.constant 0 : index
    %c0_48 = arith.constant 0 : index
    %72 = vector.load %arg4[%c0_47, %c0_48] : memref<8x128xf32, #tpu.memory_space<vmem>>, vector<8x128xf32>
    %c576_49 = arith.constant 576 : index
    %c0_50 = arith.constant 0 : index
    %73 = vector.load %arg2[%c576_49, %c0_50] : memref<776x128xf32, #tpu.memory_space<vmem>>, vector<128x128xf32>
    %cst_51 = arith.constant dense<0.000000e+00> : vector<8x128xf32>
    %74 = tpu.matmul %72, %73, %cst_51 {dimension_numbers = #tpu.dot_dimension_numbers<[1], [0], [0], [1], [0, 0, 1, 1], [], []>} : vector<8x128xf32>, vector<128x128xf32>, vector<8x128xf32> -> vector<8x128xf32>
    %75 = vector.extract_strided_slice %74 {offsets = [0, 0], sizes = [1, 128], strides = [1, 1]} : vector<8x128xf32> to vector<1x128xf32>
    %cst_52 = arith.constant 0.001953125 : f32
    %76 = vector.broadcast %cst_52 : f32 to vector<1x128xf32>
    %77 = arith.mulf %75, %76 : vector<1x128xf32>
    %78 = vector.extract_strided_slice %74 {offsets = [1, 0], sizes = [1, 128], strides = [1, 1]} : vector<8x128xf32> to vector<1x128xf32>
    %cst_53 = arith.constant 0.001953125 : f32
    %79 = vector.broadcast %cst_53 : f32 to vector<1x128xf32>
    %80 = arith.mulf %78, %79 : vector<1x128xf32>
    %81 = arith.mulf %77, %77 : vector<1x128xf32>
    %82 = arith.subf %80, %81 : vector<1x128xf32>
    %cst_54 = arith.constant 9.99999974E-6 : f32
    %83 = vector.broadcast %cst_54 : f32 to vector<1x128xf32>
    %84 = arith.addf %82, %83 : vector<1x128xf32>
    %85 = math.rsqrt %84 : vector<1x128xf32>
    %86 = arith.mulf %63, %85 : vector<1x128xf32>
    %87 = arith.mulf %77, %86 : vector<1x128xf32>
    %88 = arith.subf %64, %87 : vector<1x128xf32>
    %89 = vector.broadcast %86 : vector<1x128xf32> to vector<32x128xf32>
    %90 = arith.mulf %62, %89 : vector<32x128xf32>
    %91 = vector.broadcast %88 : vector<1x128xf32> to vector<32x128xf32>
    %92 = arith.addf %90, %91 : vector<32x128xf32>
    %cst_55 = arith.constant 0.000000e+00 : f32
    %93 = vector.broadcast %cst_55 : f32 to vector<32x128xf32>
    %94 = arith.maximumf %92, %93 : vector<32x128xf32>
    %c0_56 = arith.constant 0 : index
    %c0_57 = arith.constant 0 : index
    %95 = vector.load %arg3[%c0_56, %c0_57] : memref<32x128xf32, #tpu.memory_space<vmem>>, vector<32x128xf32>
    tpu.vector_store %arg3[%c0_56, %c0_57], %94 {strides = array<i32>} : memref<32x128xf32, #tpu.memory_space<vmem>>, vector<32x128xf32>,
    return
  }
  func.func @transform_0(%arg0: i32) -> (i32, i32) {
    %c0_i32 = arith.constant 0 : i32
    %c0_i32_0 = arith.constant 0 : i32
    %c0_i32_1 = arith.constant 0 : i32
    return %c0_i32, %c0_i32_0 : i32, i32
  }
  func.func @transform_1(%arg0: i32) -> (i32, i32) {
    %c0_i32 = arith.constant 0 : i32
    %c0_i32_0 = arith.constant 0 : i32
    %c0_i32_1 = arith.constant 0 : i32
    return %c0_i32, %c0_i32_0 : i32, i32
  }
  func.func @transform_2(%arg0: i32) -> (i32, i32) {
    %c0_i32 = arith.constant 0 : i32
    %c0_i32_0 = arith.constant 0 : i32
    %c0_i32_1 = arith.constant 0 : i32
    return %c0_i32, %c0_i32_0 : i32, i32
  }
}

</mosaic_0001>

<llo_original>
// kernel: tpu_custom_call.1
$region0: #{tpu_custom_call.1}
  #allocation0 [shape = 'u32[]', space=smem, size = 0x4, offset = 0x4, fixed_abs, tag = 'smem constant byte address 0x4 - core index']
  #allocation1 [shape = 'u32[72,128]{1,0:T(1,128)}', space=vmem, size = 0x9000, scoped, tag = 'internal scratch']
  #allocation2 [shape = 'f32[8,128]{1,0:T(8,128)}', space=vmem, size = 0x1000, scoped, tag = 'scratch operand']
  %s0 = inlined_call_operand.hbm [shape: f32[32,64], index: 0, kind: input, shape index: {}]
  %s1 = inlined_call_operand.hbm [shape: f32[776,128], index: 1, kind: input, shape index: {}]
  %s2 = inlined_call_operand.hbm [shape: f32[32,128], index: 2, kind: output, shape index: {}]
  %s3 = sld [smem:[#allocation0]]
  $region26: #{tpu_custom_call.1} parent=0
    _
  %s5 = ssub.s32 1, %s3
  %s6 = scalar_select 0, %s5, %s3
  $region1: #{tpu_custom_call.1} parent=0
    #allocation3 [shape = 'u8[16384]{0}', space=vmem, size = 0x4000, scoped, tag = 'input window, operand 0, single buffered']
    #allocation4 [shape = 's32[1]{0}', space=sflag, size = 0x4, scoped, tag = 'scoped memory for tpu_custom_call.1']
    #allocation5 [shape = 's32[1]{0}', space=sflag, size = 0x4, scoped, tag = 'scoped memory for tpu_custom_call.1']
    #allocation6 [shape = 'u8[397312]{0}', space=vmem, size = 0x61000, scoped, tag = 'input window, operand 1, single buffered']
    #allocation7 [shape = 's32[1]{0}', space=sflag, size = 0x4, scoped, tag = 'scoped memory for tpu_custom_call.1']
    #allocation8 [shape = 'u8[16384]{0}', space=vmem, size = 0x4000, scoped, tag = 'output window, operand 0, single buffered']
    %7 = vsyncpa [#allocation4], 0
    %8 = vsyncpa [#allocation7], 0
    %9 = vsyncpa [#allocation5], 0
    // Predicated region
    $region2: #{tpu_custom_call.1} parent=1 // pred_check
      _
    $region3: #{tpu_custom_call.1} parent=1 // pred_check_branch
      %11 = sbr.rel (0) target = $region5
    $region4: #{tpu_custom_call.1} parent=1 // pred_region
      %13 = vsyncadd [#allocation4], 0
      %s14 = sshll.u32 %s0, 4
      %s15 = int_to_ptr.hbm [resolvable:$true] %s14
      %s16 = sshll.u32 [#allocation3], 4
      %s17 = int_to_ptr.vmem [resolvable:$true] %s16
      %22 = dma.hbm_to_vmem [thread:$0]  %s15, 512, %s17, [#allocation4], 128, 128, 8
    $region5: #{tpu_custom_call.1} parent=1 // pred_fallthru
      _
    // Predicated region
    $region6: #{tpu_custom_call.1} parent=1 // pred_check
      _
    $region7: #{tpu_custom_call.1} parent=1 // pred_check_branch
      %24 = sbr.rel (0) target = $region9
    $region8: #{tpu_custom_call.1} parent=1 // pred_region
      %26 = vsyncadd [#allocation7], 0
      %s27 = sshll.u32 %s1, 4
      %s28 = int_to_ptr.hbm [resolvable:$true] %s27
      %s29 = sshll.u32 [#allocation6], 4
      %s30 = int_to_ptr.vmem [resolvable:$true] %s29
      %35 = dma.hbm_to_vmem [thread:$0]  %s28, 12416, %s30, [#allocation7], 128, 128, 8
    $region9: #{tpu_custom_call.1} parent=1 // pred_fallthru
      _
    // Predicated region
    $region10: #{tpu_custom_call.1} parent=1 // pred_check
      _
    $region11: #{tpu_custom_call.1} parent=1 // pred_check_branch
      %37 = sbr.rel (0) target = $region13
    $region12: #{tpu_custom_call.1} parent=1 // pred_region
      %39 = dma.done [#allocation4], 512
    $region13: #{tpu_custom_call.1} parent=1 // pred_fallthru
      _
    // Predicated region
    $region14: #{tpu_custom_call.1} parent=1 // pred_check
      _
    $region15: #{tpu_custom_call.1} parent=1 // pred_check_branch
      %41 = sbr.rel (0) target = $region17
    $region16: #{tpu_custom_call.1} parent=1 // pred_region
      %43 = dma.done [#allocation7], 12416
    $region17: #{tpu_custom_call.1} parent=1 // pred_fallthru
      _
    %44 = vst [vmem:[#allocation2] sm:$0xff] 0.0
    %v45 = vld [vmem:[#allocation3] sm:$0xff]
    %v46 = vld [vmem:[#allocation3 + $0x8] sm:$0xff]
    %v47 = vld [vmem:[#allocation3 + $0x10] sm:$0xff]
    %v48 = vld [vmem:[#allocation3 + $0x18] sm:$0xff]
    %v49 = vld [vmem:[#allocation6 + $0x2c0] sm:$0xff]
    %v50 = vld [vmem:[#allocation6 + $0x2c8] sm:$0xff]
    %v51 = vld [vmem:[#allocation6 + $0x2d0] sm:$0xff]
    %v52 = vld [vmem:[#allocation6 + $0x2d8] sm:$0xff]
    %v53 = vld [vmem:[#allocation6 + $0x2e0] sm:$0xff]
    %v54 = vld [vmem:[#allocation6 + $0x2e8] sm:$0xff]
    %v55 = vld [vmem:[#allocation6 + $0x2f0] sm:$0xff]
    %v56 = vld [vmem:[#allocation6 + $0x2f8] sm:$0xff]
    %v57 = vld [vmem:[#allocation6 + $0x40] sm:$0xff]
    %v58 = vld [vmem:[#allocation6 + $0x48] sm:$0xff]
    %v59 = vld [vmem:[#allocation6 + $0x50] sm:$0xff]
    %v60 = vld [vmem:[#allocation6 + $0x58] sm:$0xff]
    %v61 = vld [vmem:[#allocation6 + $0x60] sm:$0xff]
    %v62 = vld [vmem:[#allocation6 + $0x68] sm:$0xff]
    %v63 = vld [vmem:[#allocation6 + $0x70] sm:$0xff]
    %v64 = vld [vmem:[#allocation6 + $0x78] sm:$0xff]
    %v65 = vrot.slane %v45, 7
    %v66 = vrot.slane %v46, 7
    %v67 = vrot.slane %v47, 7
    %v68 = vrot.slane %v48, 7
    %v69 = vlaneseq
    %v70 = vshrl.u32 %v69, 7
    %vm71 = vcmp.lt.s32.totalorder %v70, 1
    %v72 = vsel %vm71, %v67, %v68
    %v73 = vsel %vm71, %v66, %v67
    %v74 = vsel %vm71, %v65, %v66
    %v75 = vsel %vm71, %v68, %v65
    %v76 = vld [vmem:[#allocation6] sm:$0xff]
    %v77 = vld [vmem:[#allocation6 + $0x8] sm:$0xff]
    %v78 = vld [vmem:[#allocation6 + $0x10] sm:$0xff]
    %v79 = vld [vmem:[#allocation6 + $0x18] sm:$0xff]
    %v80 = vld [vmem:[#allocation6 + $0x20] sm:$0xff]
    %v81 = vld [vmem:[#allocation6 + $0x28] sm:$0xff]
    %v82 = vld [vmem:[#allocation6 + $0x30] sm:$0xff]
    %v83 = vld [vmem:[#allocation6 + $0x38] sm:$0xff]
    %vm84 = vcmask 523264
    %v86 = vsel %vm84, %v75, 0
    %v89 = vsel %vm84, %v74, 0
    %v92 = vsel %vm84, %v73, 0
    %v95 = vsel %vm84, %v72, 0
    %97 = vmatpush.msra.mxu0 0.0
    %98 = vmatpush.msra.mxu0 0.0
    %99 = vmatpush.msra.mxu0 0.0
    %100 = vmatpush.msra.mxu0 0.0
    %101 = vmatpush.msra.mxu0 0.0
    %102 = vmatpush.msra.mxu0 0.0
    %103 = vmatpush.msra.mxu0 0.0
    %104 = vmatpush.msra.mxu0 0.0
    %105 = vmatpush.msra.mxu0 %v83
    %106 = vmatpush.msra.mxu0 %v82
    %107 = vmatpush.msra.mxu0 %v81
    %108 = vmatpush.msra.mxu0 %v80
    %109 = vmatpush.msra.mxu0 %v79
    %110 = vmatpush.msra.mxu0 %v78
    %111 = vmatpush.msra.mxu0 %v77
    %112 = vmatpush.msra.mxu0 %v76
    %113 = vmatmul.f32.gmra.mxu0 %v86
    %v114 = vpop.f32.mrf.mxu0
    %v115 = vadd.f32 0.0, %v114
    %116 = vmatmul.f32.gmra.mxu0 %v89
    %v117 = vpop.f32.mrf.mxu0
    %v118 = vadd.f32 0.0, %v117
    %119 = vmatmul.f32.gmra.mxu0 %v92
    %v120 = vpop.f32.mrf.mxu0
    %v121 = vadd.f32 0.0, %v120
    %122 = vmatmul.f32.gmra.mxu0 %v95
    %v123 = vpop.f32.mrf.mxu0
    %v124 = vadd.f32 0.0, %v123
    %125 = vdwg.mxu0
    %v126 = vmul.f32 %v49, %v115
    %v127 = vmul.f32 %v50, %v118
    %v128 = vmul.f32 %v51, %v121
    %v129 = vmul.f32 %v52, %v124
    %v131 = vsel %vm84, %v45, 0
    %v134 = vsel %vm84, %v46, 0
    %v137 = vsel %vm84, %v47, 0
    %v140 = vsel %vm84, %v48, 0
    %142 = vmatpush.msra.mxu0 0.0
    %143 = vmatpush.msra.mxu0 0.0
    %144 = vmatpush.msra.mxu0 0.0
    %145 = vmatpush.msra.mxu0 0.0
    %146 = vmatpush.msra.mxu0 0.0
    %147 = vmatpush.msra.mxu0 0.0
    %148 = vmatpush.msra.mxu0 0.0
    %149 = vmatpush.msra.mxu0 0.0
    %150 = vmatpush.msra.mxu0 %v64
    %151 = vmatpush.msra.mxu0 %v63
    %152 = vmatpush.msra.mxu0 %v62
    %153 = vmatpush.msra.mxu0 %v61
    %154 = vmatpush.msra.mxu0 %v60
    %155 = vmatpush.msra.mxu0 %v59
    %156 = vmatpush.msra.mxu0 %v58
    %157 = vmatpush.msra.mxu0 %v57
    %158 = vmatmul.f32.gmra.mxu0 %v131
    %v159 = vpop.f32.mrf.mxu0
    %v160 = vadd.f32 %v126, %v159
    %161 = vmatmul.f32.gmra.mxu0 %v134
    %v162 = vpop.f32.mrf.mxu0
    %v163 = vadd.f32 %v127, %v162
    %164 = vmatmul.f32.gmra.mxu0 %v137
    %v165 = vpop.f32.mrf.mxu0
    %v166 = vadd.f32 %v128, %v165
    %167 = vmatmul.f32.gmra.mxu0 %v140
    %v168 = vpop.f32.mrf.mxu0
    %v169 = vadd.f32 %v129, %v168
    %170 = vdwg.mxu0
    %v171 = vrot.slane %v45, 1
    %v172 = vrot.slane %v46, 1
    %v173 = vrot.slane %v47, 1
    %v174 = vrot.slane %v48, 1
    %vm175 = vcmp.lt.s32.totalorder %v70, 7
    %v176 = vsel %vm175, %v173, %v174
    %v177 = vsel %vm175, %v172, %v173
    %v178 = vsel %vm175, %v171, %v172
    %v179 = vsel %vm175, %v174, %v171
    %v180 = vld [vmem:[#allocation6 + $0x80] sm:$0xff]
    %v181 = vld [vmem:[#allocation6 + $0x88] sm:$0xff]
    %v182 = vld [vmem:[#allocation6 + $0x90] sm:$0xff]
    %v183 = vld [vmem:[#allocation6 + $0x98] sm:$0xff]
    %v184 = vld [vmem:[#allocation6 + $0xa0] sm:$0xff]
    %v185 = vld [vmem:[#allocation6 + $0xa8] sm:$0xff]
    %v186 = vld [vmem:[#allocation6 + $0xb0] sm:$0xff]
    %v187 = vld [vmem:[#allocation6 + $0xb8] sm:$0xff]
    %v189 = vsel %vm84, %v178, 0
    %v192 = vsel %vm84, %v177, 0
    %v195 = vsel %vm84, %v176, 0
    %v198 = vsel %vm84, %v179, 0
    %200 = vmatpush.msra.mxu0 0.0
    %201 = vmatpush.msra.mxu0 0.0
    %202 = vmatpush.msra.mxu0 0.0
    %203 = vmatpush.msra.mxu0 0.0
    %204 = vmatpush.msra.mxu0 0.0
    %205 = vmatpush.msra.mxu0 0.0
    %206 = vmatpush.msra.mxu0 0.0
    %207 = vmatpush.msra.mxu0 0.0
    %208 = vmatpush.msra.mxu0 %v187
    %209 = vmatpush.msra.mxu0 %v186
    %210 = vmatpush.msra.mxu0 %v185
    %211 = vmatpush.msra.mxu0 %v184
    %212 = vmatpush.msra.mxu0 %v183
    %213 = vmatpush.msra.mxu0 %v182
    %214 = vmatpush.msra.mxu0 %v181
    %215 = vmatpush.msra.mxu0 %v180
    %216 = vmatmul.f32.gmra.mxu0 %v189
    %v217 = vpop.f32.mrf.mxu0
    %v218 = vadd.f32 0.0, %v217
    %219 = vmatmul.f32.gmra.mxu0 %v192
    %v220 = vpop.f32.mrf.mxu0
    %v221 = vadd.f32 0.0, %v220
    %222 = vmatmul.f32.gmra.mxu0 %v195
    %v223 = vpop.f32.mrf.mxu0
    %v224 = vadd.f32 0.0, %v223
    %225 = vmatmul.f32.gmra.mxu0 %v198
    %v226 = vpop.f32.mrf.mxu0
    %v227 = vadd.f32 0.0, %v226
    %228 = vdwg.mxu0
    %v229 = vmul.f32 %v53, %v218
    %v230 = vmul.f32 %v54, %v221
    %v231 = vmul.f32 %v55, %v224
    %v232 = vmul.f32 %v56, %v227
    %v233 = vadd.f32 %v160, %v229
    %v234 = vadd.f32 %v163, %v230
    %v235 = vadd.f32 %v166, %v231
    %v236 = vadd.f32 %v169, %v232
    %v237 = vld [vmem:[#allocation6 + $0x300] sm:$0x1]
    %v238 = vld [vmem:[#allocation6 + $0x301] sm:$0x1]
    %v239 = vadd.f32 %v233, %v234
    %v240 = vadd.f32 %v239, %v235
    %v241 = vadd.f32 %v240, %v236
    %v242 = vrot.slane %v241, 4
    %v243 = vadd.f32 %v241, %v242
    %v244 = vrot.slane %v243, 2
    %v245 = vadd.f32 %v243, %v244
    %v246 = vrot.slane %v245, 1
    %v247 = vadd.f32 %v245, %v246
    %248 = vst [vmem:[#allocation2] sm:$0x1] %v247
    %v249 = vmul.f32 %v233, %v233
    %v250 = vmul.f32 %v234, %v234
    %v251 = vmul.f32 %v235, %v235
    %v252 = vmul.f32 %v236, %v236
    %v253 = vadd.f32 %v249, %v250
    %v254 = vadd.f32 %v253, %v251
    %v255 = vadd.f32 %v254, %v252
    %v256 = vrot.slane %v255, 4
    %v257 = vadd.f32 %v255, %v256
    %v258 = vrot.slane %v257, 2
    %v259 = vadd.f32 %v257, %v258
    %v260 = vrot.slane %v259, 1
    %v261 = vadd.f32 %v259, %v260
    %262 = vst [vmem:[#allocation2 + $0x1] sm:$0x1] %v261
    %v263 = vld [vmem:[#allocation2] sm:$0xff]
    %v264 = vld [vmem:[#allocation6 + $0x240] sm:$0xff]
    %v265 = vld [vmem:[#allocation6 + $0x248] sm:$0xff]
    %v266 = vld [vmem:[#allocation6 + $0x250] sm:$0xff]
    %v267 = vld [vmem:[#allocation6 + $0x258] sm:$0xff]
    %v268 = vld [vmem:[#allocation6 + $0x260] sm:$0xff]
    %v269 = vld [vmem:[#allocation6 + $0x268] sm:$0xff]
    %v270 = vld [vmem:[#allocation6 + $0x270] sm:$0xff]
    %v271 = vld [vmem:[#allocation6 + $0x278] sm:$0xff]
    %v272 = vld [vmem:[#allocation6 + $0x280] sm:$0xff]
    %v273 = vld [vmem:[#allocation6 + $0x288] sm:$0xff]
    %v274 = vld [vmem:[#allocation6 + $0x290] sm:$0xff]
    %v275 = vld [vmem:[#allocation6 + $0x298] sm:$0xff]
    %v276 = vld [vmem:[#allocation6 + $0x2a0] sm:$0xff]
    %v277 = vld [vmem:[#allocation6 + $0x2a8] sm:$0xff]
    %v278 = vld [vmem:[#allocation6 + $0x2b0] sm:$0xff]
    %v279 = vld [vmem:[#allocation6 + $0x2b8] sm:$0xff]
    %280 = vmatpush.msra.mxu0 %v279
    %281 = vmatpush.msra.mxu0 %v278
    %282 = vmatpush.msra.mxu0 %v277
    %283 = vmatpush.msra.mxu0 %v276
    %284 = vmatpush.msra.mxu0 %v275
    %285 = vmatpush.msra.mxu0 %v274
    %286 = vmatpush.msra.mxu0 %v273
    %287 = vmatpush.msra.mxu0 %v272
    %288 = vmatpush.msra.mxu0 %v271
    %289 = vmatpush.msra.mxu0 %v270
    %290 = vmatpush.msra.mxu0 %v269
    %291 = vmatpush.msra.mxu0 %v268
    %292 = vmatpush.msra.mxu0 %v267
    %293 = vmatpush.msra.mxu0 %v266
    %294 = vmatpush.msra.mxu0 %v265
    %295 = vmatpush.msra.mxu0 %v264
    %296 = vmatmul.f32.gmra.mxu0 %v263
    %v297 = vpop.f32.mrf.mxu0
    %v298 = vadd.f32 0.0, %v297
    %299 = vdwg.mxu0
    %v300 = vmul.f32 %v298, 0.001953125
    %v301 = vmul.f32 %v300, %v300
    %v303 = vrot.slane %v301, 7
    %v305 = vsub.f32 %v300, %v303
    %v306 = vadd.f32 %v305, 1e-05
    %v307 = vrsqrt.pop %v306
    %v308 = vmul.f32 %v307, %v306
    %v309 = vmul.f32 %v308, %v307
    %v310 = vmul.f32 0.5, %v309
    %v311 = vsub.f32 1.5, %v310
    %v312 = vmul.f32 %v307, %v311
    %vm313 = vweird.f32 %v306
    %vm314 = vweird.f32 %v307
    %vm315 = vmor %vm313, %vm314
    %v316 = vsel %vm315, %v307, %v312
    %v318 = vrot.slane %v316, 1
    %v320 = vmul.f32 %v237, %v318
    %v321 = vmul.f32 %v300, %v320
    %v322 = vsub.f32 %v238, %v321
    %v323 = vperm.slane %v320, 0
    %v324 = vmul.f32 %v233, %v323
    %v325 = vmul.f32 %v234, %v323
    %v326 = vmul.f32 %v235, %v323
    %v327 = vmul.f32 %v236, %v323
    %v328 = vperm.slane %v322, 0
    %v329 = vadd.f32 %v324, %v328
    %v330 = vadd.f32 %v325, %v328
    %v331 = vadd.f32 %v326, %v328
    %v332 = vadd.f32 %v327, %v328
    %v333 = vmax.f32 %v329, 0.0
    %v334 = vmax.f32 %v330, 0.0
    %v335 = vmax.f32 %v331, 0.0
    %v336 = vmax.f32 %v332, 0.0
    %v337 = vld [vmem:[#allocation6 + $0x2c0] sm:$0xff]
    %v338 = vld [vmem:[#allocation6 + $0x2c8] sm:$0xff]
    %v339 = vld [vmem:[#allocation6 + $0x2d0] sm:$0xff]
    %v340 = vld [vmem:[#allocation6 + $0x2d8] sm:$0xff]
    %v341 = vld [vmem:[#allocation6 + $0x2e0] sm:$0xff]
    %v342 = vld [vmem:[#allocation6 + $0x2e8] sm:$0xff]
    %v343 = vld [vmem:[#allocation6 + $0x2f0] sm:$0xff]
    %v344 = vld [vmem:[#allocation6 + $0x2f8] sm:$0xff]
    %v345 = vld [vmem:[#allocation6 + $0x140] sm:$0xff]
    %v346 = vld [vmem:[#allocation6 + $0x148] sm:$0xff]
    %v347 = vld [vmem:[#allocation6 + $0x150] sm:$0xff]
    %v348 = vld [vmem:[#allocation6 + $0x158] sm:$0xff]
    %v349 = vld [vmem:[#allocation6 + $0x160] sm:$0xff]
    %v350 = vld [vmem:[#allocation6 + $0x168] sm:$0xff]
    %v351 = vld [vmem:[#allocation6 + $0x170] sm:$0xff]
    %v352 = vld [vmem:[#allocation6 + $0x178] sm:$0xff]
    %v353 = vld [vmem:[#allocation6 + $0x180] sm:$0xff]
    %v354 = vld [vmem:[#allocation6 + $0x188] sm:$0xff]
    %v355 = vld [vmem:[#allocation6 + $0x190] sm:$0xff]
    %v356 = vld [vmem:[#allocation6 + $0x198] sm:$0xff]
    %v357 = vld [vmem:[#allocation6 + $0x1a0] sm:$0xff]
    %v358 = vld [vmem:[#allocation6 + $0x1a8] sm:$0xff]
    %v359 = vld [vmem:[#allocation6 + $0x1b0] sm:$0xff]
    %v360 = vld [vmem:[#allocation6 + $0x1b8] sm:$0xff]
    %v361 = vrot.slane %v333, 7
    %v362 = vrot.slane %v334, 7
    %v363 = vrot.slane %v335, 7
    %v364 = vrot.slane %v336, 7
    %v365 = vsel %vm71, %v363, %v364
    %v366 = vsel %vm71, %v362, %v363
    %v367 = vsel %vm71, %v361, %v362
    %v368 = vsel %vm71, %v364, %v361
    %v369 = vld [vmem:[#allocation6 + $0xc0] sm:$0xff]
    %v370 = vld [vmem:[#allocation6 + $0xc8] sm:$0xff]
    %v371 = vld [vmem:[#allocation6 + $0xd0] sm:$0xff]
    %v372 = vld [vmem:[#allocation6 + $0xd8] sm:$0xff]
    %v373 = vld [vmem:[#allocation6 + $0xe0] sm:$0xff]
    %v374 = vld [vmem:[#allocation6 + $0xe8] sm:$0xff]
    %v375 = vld [vmem:[#allocation6 + $0xf0] sm:$0xff]
    %v376 = vld [vmem:[#allocation6 + $0xf8] sm:$0xff]
    %v377 = vld [vmem:[#allocation6 + $0x100] sm:$0xff]
    %v378 = vld [vmem:[#allocation6 + $0x108] sm:$0xff]
    %v379 = vld [vmem:[#allocation6 + $0x110] sm:$0xff]
    %v380 = vld [vmem:[#allocation6 + $0x118] sm:$0xff]
    %v381 = vld [vmem:[#allocation6 + $0x120] sm:$0xff]
    %v382 = vld [vmem:[#allocation6 + $0x128] sm:$0xff]
    %v383 = vld [vmem:[#allocation6 + $0x130] sm:$0xff]
    %v384 = vld [vmem:[#allocation6 + $0x138] sm:$0xff]
    %385 = vmatpush.msra.mxu0 %v384
    %386 = vmatpush.msra.mxu0 %v383
    %387 = vmatpush.msra.mxu0 %v382
    %388 = vmatpush.msra.mxu0 %v381
    %389 = vmatpush.msra.mxu0 %v380
    %390 = vmatpush.msra.mxu0 %v379
    %391 = vmatpush.msra.mxu0 %v378
    %392 = vmatpush.msra.mxu0 %v377
    %393 = vmatpush.msra.mxu0 %v376
    %394 = vmatpush.msra.mxu0 %v375
    %395 = vmatpush.msra.mxu0 %v374
    %396 = vmatpush.msra.mxu0 %v373
    %397 = vmatpush.msra.mxu0 %v372
    %398 = vmatpush.msra.mxu0 %v371
    %399 = vmatpush.msra.mxu0 %v370
    %400 = vmatpush.msra.mxu0 %v369
    %401 = vmatmul.f32.gmra.mxu0 %v368
    %v402 = vpop.f32.mrf.mxu0
    %v403 = vadd.f32 0.0, %v402
    %404 = vmatmul.f32.gmra.mxu0 %v367
    %v405 = vpop.f32.mrf.mxu0
    %v406 = vadd.f32 0.0, %v405
    %407 = vmatmul.f32.gmra.mxu0 %v366
    %v408 = vpop.f32.mrf.mxu0
    %v409 = vadd.f32 0.0, %v408
    %410 = vmatmul.f32.gmra.mxu0 %v365
    %v411 = vpop.f32.mrf.mxu0
    %v412 = vadd.f32 0.0, %v411
    %413 = vdwg.mxu0
    %v414 = vmul.f32 %v337, %v403
    %v415 = vmul.f32 %v338, %v406
    %v416 = vmul.f32 %v339, %v409
    %v417 = vmul.f32 %v340, %v412
    %418 = vmatpush.msra.mxu0 %v360
    %419 = vmatpush.msra.mxu0 %v359
    %420 = vmatpush.msra.mxu0 %v358
    %421 = vmatpush.msra.mxu0 %v357
    %422 = vmatpush.msra.mxu0 %v356
    %423 = vmatpush.msra.mxu0 %v355
    %424 = vmatpush.msra.mxu0 %v354
    %425 = vmatpush.msra.mxu0 %v353
    %426 = vmatpush.msra.mxu0 %v352
    %427 = vmatpush.msra.mxu0 %v351
    %428 = vmatpush.msra.mxu0 %v350
    %429 = vmatpush.msra.mxu0 %v349
    %430 = vmatpush.msra.mxu0 %v348
    %431 = vmatpush.msra.mxu0 %v347
    %432 = vmatpush.msra.mxu0 %v346
    %433 = vmatpush.msra.mxu0 %v345
    %434 = vmatmul.f32.gmra.mxu0 %v333
    %v435 = vpop.f32.mrf.mxu0
    %v436 = vadd.f32 %v414, %v435
    %437 = vmatmul.f32.gmra.mxu0 %v334
    %v438 = vpop.f32.mrf.mxu0
    %v439 = vadd.f32 %v415, %v438
    %440 = vmatmul.f32.gmra.mxu0 %v335
    %v441 = vpop.f32.mrf.mxu0
    %v442 = vadd.f32 %v416, %v441
    %443 = vmatmul.f32.gmra.mxu0 %v336
    %v444 = vpop.f32.mrf.mxu0
    %v445 = vadd.f32 %v417, %v444
    %446 = vdwg.mxu0
    %v447 = vrot.slane %v333, 1
    %v448 = vrot.slane %v334, 1
    %v449 = vrot.slane %v335, 1
    %v450 = vrot.slane %v336, 1
    %v451 = vsel %vm175, %v449, %v450
    %v452 = vsel %vm175, %v448, %v449
    %v453 = vsel %vm175, %v447, %v448
    %v454 = vsel %vm175, %v450, %v447
    %v455 = vld [vmem:[#allocation6 + $0x1c0] sm:$0xff]
    %v456 = vld [vmem:[#allocation6 + $0x1c8] sm:$0xff]
    %v457 = vld [vmem:[#allocation6 + $0x1d0] sm:$0xff]
    %v458 = vld [vmem:[#allocation6 + $0x1d8] sm:$0xff]
    %v459 = vld [vmem:[#allocation6 + $0x1e0] sm:$0xff]
    %v460 = vld [vmem:[#allocation6 + $0x1e8] sm:$0xff]
    %v461 = vld [vmem:[#allocation6 + $0x1f0] sm:$0xff]
    %v462 = vld [vmem:[#allocation6 + $0x1f8] sm:$0xff]
    %v463 = vld [vmem:[#allocation6 + $0x200] sm:$0xff]
    %v464 = vld [vmem:[#allocation6 + $0x208] sm:$0xff]
    %v465 = vld [vmem:[#allocation6 + $0x210] sm:$0xff]
    %v466 = vld [vmem:[#allocation6 + $0x218] sm:$0xff]
    %v467 = vld [vmem:[#allocation6 + $0x220] sm:$0xff]
    %v468 = vld [vmem:[#allocation6 + $0x228] sm:$0xff]
    %v469 = vld [vmem:[#allocation6 + $0x230] sm:$0xff]
    %v470 = vld [vmem:[#allocation6 + $0x238] sm:$0xff]
    %471 = vmatpush.msra.mxu0 %v470
    %472 = vmatpush.msra.mxu0 %v469
    %473 = vmatpush.msra.mxu0 %v468
    %474 = vmatpush.msra.mxu0 %v467
    %475 = vmatpush.msra.mxu0 %v466
    %476 = vmatpush.msra.mxu0 %v465
    %477 = vmatpush.msra.mxu0 %v464
    %478 = vmatpush.msra.mxu0 %v463
    %479 = vmatpush.msra.mxu0 %v462
    %480 = vmatpush.msra.mxu0 %v461
    %481 = vmatpush.msra.mxu0 %v460
    %482 = vmatpush.msra.mxu0 %v459
    %483 = vmatpush.msra.mxu0 %v458
    %484 = vmatpush.msra.mxu0 %v457
    %485 = vmatpush.msra.mxu0 %v456
    %486 = vmatpush.msra.mxu0 %v455
    %487 = vmatmul.f32.gmra.mxu0 %v453
    %v488 = vpop.f32.mrf.mxu0
    %v489 = vadd.f32 0.0, %v488
    %490 = vmatmul.f32.gmra.mxu0 %v452
    %v491 = vpop.f32.mrf.mxu0
    %v492 = vadd.f32 0.0, %v491
    %493 = vmatmul.f32.gmra.mxu0 %v451
    %v494 = vpop.f32.mrf.mxu0
    %v495 = vadd.f32 0.0, %v494
    %496 = vmatmul.f32.gmra.mxu0 %v454
    %v497 = vpop.f32.mrf.mxu0
    %v498 = vadd.f32 0.0, %v497
    %499 = vdwg.mxu0
    %v500 = vmul.f32 %v341, %v489
    %v501 = vmul.f32 %v342, %v492
    %v502 = vmul.f32 %v343, %v495
    %v503 = vmul.f32 %v344, %v498
    %v504 = vadd.f32 %v436, %v500
    %v505 = vadd.f32 %v439, %v501
    %v506 = vadd.f32 %v442, %v502
    %v507 = vadd.f32 %v445, %v503
    %v508 = vld [vmem:[#allocation6 + $0x302] sm:$0x1]
    %v509 = vld [vmem:[#allocation6 + $0x303] sm:$0x1]
    %v510 = vadd.f32 %v504, %v505
    %v511 = vadd.f32 %v510, %v506
    %v512 = vadd.f32 %v511, %v507
    %v513 = vrot.slane %v512, 4
    %v514 = vadd.f32 %v512, %v513
    %v515 = vrot.slane %v514, 2
    %v516 = vadd.f32 %v514, %v515
    %v517 = vrot.slane %v516, 1
    %v518 = vadd.f32 %v516, %v517
    %519 = vst [vmem:[#allocation2] sm:$0x1] %v518
    %v520 = vmul.f32 %v504, %v504
    %v521 = vmul.f32 %v505, %v505
    %v522 = vmul.f32 %v506, %v506
    %v523 = vmul.f32 %v507, %v507
    %v524 = vadd.f32 %v520, %v521
    %v525 = vadd.f32 %v524, %v522
    %v526 = vadd.f32 %v525, %v523
    %v527 = vrot.slane %v526, 4
    %v528 = vadd.f32 %v526, %v527
    %v529 = vrot.slane %v528, 2
    %v530 = vadd.f32 %v528, %v529
    %v531 = vrot.slane %v530, 1
    %v532 = vadd.f32 %v530, %v531
    %533 = vst [vmem:[#allocation2 + $0x1] sm:$0x1] %v532
    %v534 = vld [vmem:[#allocation2] sm:$0xff]
    %v535 = vld [vmem:[#allocation6 + $0x240] sm:$0xff]
    %v536 = vld [vmem:[#allocation6 + $0x248] sm:$0xff]
    %v537 = vld [vmem:[#allocation6 + $0x250] sm:$0xff]
    %v538 = vld [vmem:[#allocation6 + $0x258] sm:$0xff]
    %v539 = vld [vmem:[#allocation6 + $0x260] sm:$0xff]
    %v540 = vld [vmem:[#allocation6 + $0x268] sm:$0xff]
    %v541 = vld [vmem:[#allocation6 + $0x270] sm:$0xff]
    %v542 = vld [vmem:[#allocation6 + $0x278] sm:$0xff]
    %v543 = vld [vmem:[#allocation6 + $0x280] sm:$0xff]
    %v544 = vld [vmem:[#allocation6 + $0x288] sm:$0xff]
    %v545 = vld [vmem:[#allocation6 + $0x290] sm:$0xff]
    %v546 = vld [vmem:[#allocation6 + $0x298] sm:$0xff]
    %v547 = vld [vmem:[#allocation6 + $0x2a0] sm:$0xff]
    %v548 = vld [vmem:[#allocation6 + $0x2a8] sm:$0xff]
    %v549 = vld [vmem:[#allocation6 + $0x2b0] sm:$0xff]
    %v550 = vld [vmem:[#allocation6 + $0x2b8] sm:$0xff]
    %551 = vmatpush.msra.mxu0 %v550
    %552 = vmatpush.msra.mxu0 %v549
    %553 = vmatpush.msra.mxu0 %v548
    %554 = vmatpush.msra.mxu0 %v547
    %555 = vmatpush.msra.mxu0 %v546
    %556 = vmatpush.msra.mxu0 %v545
    %557 = vmatpush.msra.mxu0 %v544
    %558 = vmatpush.msra.mxu0 %v543
    %559 = vmatpush.msra.mxu0 %v542
    %560 = vmatpush.msra.mxu0 %v541
    %561 = vmatpush.msra.mxu0 %v540
    %562 = vmatpush.msra.mxu0 %v539
    %563 = vmatpush.msra.mxu0 %v538
    %564 = vmatpush.msra.mxu0 %v537
    %565 = vmatpush.msra.mxu0 %v536
    %566 = vmatpush.msra.mxu0 %v535
    %567 = vmatmul.f32.gmra.mxu0 %v534
    %v568 = vpop.f32.mrf.mxu0
    %v569 = vadd.f32 0.0, %v568
    %570 = vdwg.mxu0
    %v571 = vmul.f32 %v569, 0.001953125
    %v572 = vmul.f32 %v571, %v571
    %v574 = vrot.slane %v572, 7
    %v576 = vsub.f32 %v571, %v574
    %v577 = vadd.f32 %v576, 1e-05
    %v578 = vrsqrt.pop %v577
    %v579 = vmul.f32 %v578, %v577
    %v580 = vmul.f32 %v579, %v578
    %v581 = vmul.f32 0.5, %v580
    %v582 = vsub.f32 1.5, %v581
    %v583 = vmul.f32 %v578, %v582
    %vm584 = vweird.f32 %v577
    %vm585 = vweird.f32 %v578
    %vm586 = vmor %vm584, %vm585
    %v587 = vsel %vm586, %v578, %v583
    %v589 = vrot.slane %v587, 1
    %v591 = vmul.f32 %v508, %v589
    %v592 = vmul.f32 %v571, %v591
    %v593 = vsub.f32 %v509, %v592
    %v594 = vperm.slane %v591, 0
    %v595 = vmul.f32 %v504, %v594
    %v596 = vmul.f32 %v505, %v594
    %v597 = vmul.f32 %v506, %v594
    %v598 = vmul.f32 %v507, %v594
    %v599 = vperm.slane %v593, 0
    %v600 = vadd.f32 %v595, %v599
    %v601 = vadd.f32 %v596, %v599
    %v602 = vadd.f32 %v597, %v599
    %v603 = vadd.f32 %v598, %v599
    %v604 = vmax.f32 %v600, 0.0
    %v605 = vmax.f32 %v601, 0.0
    %v606 = vmax.f32 %v602, 0.0
    %v607 = vmax.f32 %v603, 0.0
    %608 = vst [vmem:[#allocation8] sm:$0xff] %v604
    %609 = vst [vmem:[#allocation8 + $0x8] sm:$0xff] %v605
    %610 = vst [vmem:[#allocation8 + $0x10] sm:$0xff] %v606
    %611 = vst [vmem:[#allocation8 + $0x18] sm:$0xff] %v607
    // Predicated region
    $region18: #{tpu_custom_call.1} parent=1 // pred_check
      _
    $region19: #{tpu_custom_call.1} parent=1 // pred_check_branch
      %613 = sbr.rel (0) target = $region21
    $region20: #{tpu_custom_call.1} parent=1 // pred_region
      %615 = vsyncadd [#allocation5], 0
      %s616 = sshll.u32 [#allocation8], 4
      %s617 = int_to_ptr.vmem [resolvable:$true] %s616
      %s618 = sshll.u32 %s2, 4
      %s619 = int_to_ptr.hbm [resolvable:$true] %s618
      %624 = dma.vmem_to_hbm [thread:$0]  %s617, 512, %s619, [#allocation5], 128, 128, 8
    $region21: #{tpu_custom_call.1} parent=1 // pred_fallthru
      _
    // Predicated region
    $region22: #{tpu_custom_call.1} parent=1 // pred_check
      _
    $region23: #{tpu_custom_call.1} parent=1 // pred_check_branch
      %626 = sbr.rel (0) target = $region25
    $region24: #{tpu_custom_call.1} parent=1 // pred_region
      %628 = dma.done [#allocation5], 512
    $region25: #{tpu_custom_call.1} parent=1 // pred_fallthru
      _
    %629 = vsyncpa [#allocation4], 1
    %630 = vsyncpa [#allocation7], 1
    %631 = vsyncpa [#allocation5], 1

</llo_original>
